<compile_context>
chip_gen: v7x
topology: tpu7x:2x2x1
jax: 0.10.0
libtpu: 0.0.40
codegen_flags: <defaults>
</compile_context>

<pallas_src>
import numpy as np
import jax
import jax.numpy as jnp
from jax.experimental import pallas as pl
from jax.experimental.pallas import tpu as pltpu


def _round_up(v, m):
    return -(-v // m) * m


# ---------------------------------------------------------------------------
# Parameter setup (port of Sparse_Pitch_Profile.__init__, densified filters)
# ---------------------------------------------------------------------------
def build_pitch_filters(in_channels, sr, harms_range=24, division=1, norm=False):
    """Dense numpy filters W_f, W_t of shape (F, D) and effected_dim D.

    Exact port of the module's __init__; duplicate COO coordinates are summed,
    matching torch.sparse_coo_tensor @ dense semantics.
    """
    step = 1.0 / division
    midi_num = np.arange(20.5 - step / 2 - harms_range,
                         108.5 + step + harms_range, step)
    fd = 440 * np.power(2, (midi_num - 69) / 12)
    effected_dim = in_channels // 2 + 1
    x = np.arange(effected_dim)
    freq_f = x * sr / in_channels
    freq_t = sr / x[1:]
    inter_value = np.array([0, 1, 0])
    n_rows = (88 + harms_range) * division
    filter_size = (n_rows, effected_dim)

    def build(freqs, col_offset, row_iter, row_of_i):
        idxs = np.digitize(freqs, fd)
        cols, rows, values = [], [], []
        for i in row_iter:
            idx = np.where((idxs == i + 1) | (idxs == i + 2))[0]
            c = idx + col_offset
            r = np.broadcast_to(row_of_i(i), idx.shape)
            v = np.interp(freqs[idx], fd[i:i + 3], inter_value).astype(np.float32)
            if norm and len(idx):
                v = v / v.sum()
            if len(idx) == 0 and len(values) and len(values[-1]):
                c = cols[-1].copy()
                r = np.full_like(np.asarray(rows[-1]), row_of_i(i))
                v = values[-1].copy()
            cols.append(np.asarray(c))
            rows.append(np.asarray(r))
            values.append(v)
        cols = np.concatenate(cols).astype(np.int64)
        rows = np.concatenate(rows).astype(np.int64)
        values = np.concatenate(values).astype(np.float32)
        # Densify: torch.sparse_coo_tensor sums duplicate coordinates.
        W = np.zeros(filter_size, dtype=np.float32)
        np.add.at(W, (rows, cols), values)
        return W

    W_f = build(freq_f, 0,
                range(harms_range * division, (88 + 2 * harms_range) * division),
                lambda i: i - harms_range * division)
    W_t = build(freq_t, 1,
                range((88 + harms_range) * division - 1, -1, -1),
                lambda i: i)
    return W_f, W_t, effected_dim


def prepare_pitch_profile_params(in_channels, sr, harms_range=24, division=1,
                                 norm=False, compute_dtype=jnp.bfloat16):
    """One-time host-side prep, hoisted out of the per-call path.

    Filters are densified, transposed to (D, F) and zero-padded along the
    reduction axis up to the full in_channels width, so the kernel can consume
    the *untruncated* activations directly: feature columns d >= effected_dim
    multiply zero weight rows, reproducing the module's `[..., :effected_dim]`
    truncation with no wrapper-side slice/pad pass.
    """
    W_f, W_t, D = build_pitch_filters(in_channels, sr, harms_range, division, norm)
    F = W_t.shape[0]
    C = int(in_channels)

    def prep(W):
        Wp = np.zeros((C, F), dtype=np.float32)
        Wp[:D, :] = W.T
        return jnp.asarray(Wp, dtype=compute_dtype)

    return {
        "wt": prep(W_t), "wf": prep(W_f),
        "W_t": W_t, "W_f": W_f,
        "in_channels": C, "D": D, "F": F,
        "compute_dtype": compute_dtype,
    }


# ---------------------------------------------------------------------------
# Pallas kernel: both filterbank matmuls, tiled over M with resident weights
# ---------------------------------------------------------------------------
def _pitch_profile_kernel(ceps_ref, spec_ref, wt_ref, wf_ref, ppt_ref, ppf_ref):
    # (TM, C) @ (C, F) on the MXU, bf16 operands, f32 accumulation.
    # The bf16 cast happens here on the VPU so the activations are read from
    # HBM exactly once (no wrapper-side cast/slice pass).
    wdt = wt_ref.dtype
    ppt_ref[...] = jnp.dot(ceps_ref[...].astype(wdt), wt_ref[...],
                           preferred_element_type=jnp.float32)
    ppf_ref[...] = jnp.dot(spec_ref[...].astype(wdt), wf_ref[...],
                           preferred_element_type=jnp.float32)


def _pick_tile_m(M, C, F, tile_m, vmem_budget_bytes=12 << 20):
    """Largest row tile (multiple of 8, <= tile_m) whose double-buffered
    working set fits a conservative VMEM budget (safe under the 16 MiB default
    scoped limit on v5e and the 64 MiB physical VMEM on v7x)."""
    w_bytes = 2 * 2 * C * F * 2                      # two bf16 weights, 2 bufs
    per_row = 2 * 2 * C * 4 + 2 * 2 * F * 4          # 2 f32 ins + 2 f32 outs, 2 bufs
    budget = max(vmem_budget_bytes - w_bytes, 1 << 20)
    tm = min(int(tile_m), max(8, budget // per_row))
    return max(8, (tm // 8) * 8)


def sparse_pitch_profile(ceps, spec, params, tile_m=512):
    """Forward pass matching Sparse_Pitch_Profile.forward.

    ceps, spec : (batch, steps, in_channels) float arrays.
    Returns (ppt, ppf), each (batch, steps, (88 + harms_range) * division), f32.
    """
    B, S, C = ceps.shape
    assert C == params["in_channels"], "feature axis must equal in_channels"
    F = params["F"]
    wt, wf = params["wt"], params["wf"]

    M = B * S
    x_c = ceps.reshape(M, C)   # contiguous reshape: free
    x_s = spec.reshape(M, C)

    TM = _pick_tile_m(M, C, F, tile_m)
    if M <= TM:
        # Single-block case: make the block exact (sublane-rounded).  The pad,
        # if any, touches < 8 rows of a <= tile_m slab -> negligible.
        TM = _round_up(M, 8)
        M_pad = TM
    else:
        # Multi-block case: Pallas masks the ragged final block, so no
        # wrapper-side pad copy of the activations is needed.
        M_pad = M
    if M_pad != M:
        x_c = jnp.pad(x_c, ((0, M_pad - M), (0, 0)))
        x_s = jnp.pad(x_s, ((0, M_pad - M), (0, 0)))
    grid_m = pl.cdiv(M_pad, TM)

    ppt, ppf = pl.pallas_call(
        _pitch_profile_kernel,
        out_shape=(jax.ShapeDtypeStruct((M_pad, F), jnp.float32),
                   jax.ShapeDtypeStruct((M_pad, F), jnp.float32)),
        grid=(grid_m,),
        in_specs=[
            pl.BlockSpec((TM, C), lambda i: (i, 0)),   # ceps tile, streamed
            pl.BlockSpec((TM, C), lambda i: (i, 0)),   # spec tile, streamed
            pl.BlockSpec((C, F), lambda i: (0, 0)),    # W_t^T, VMEM-resident
            pl.BlockSpec((C, F), lambda i: (0, 0)),    # W_f^T, VMEM-resident
        ],
        out_specs=(
            pl.BlockSpec((TM, F), lambda i: (i, 0)),
            pl.BlockSpec((TM, F), lambda i: (i, 0)),
        ),
        compiler_params=pltpu.CompilerParams(
            dimension_semantics=("parallel",)),        # megacore-shard M on v7x
    )(x_c, x_s, wt, wf)

    ppt = ppt[:M].reshape(B, S, F)
    ppf = ppf[:M].reshape(B, S, F)
    return ppt, ppf


if __name__ == "__main__":
    # Small, deterministic configuration consistent with the module.
    in_channels = 128        # window size
    sr = 16000               # sample rate
    harms_range = 24
    division = 1
    batch, steps = 2, 8

    params = prepare_pitch_profile_params(
        in_channels, sr, harms_range=harms_range, division=division,
        norm=False, compute_dtype=jnp.bfloat16)
    D, F = params["D"], params["F"]
    W_t, W_f = params["W_t"], params["W_f"]

    key = jax.random.PRNGKey(0)
    k1, k2 = jax.random.split(key)
    # Inputs carry the full in_channels feature axis; the forward truncates to
    # effected_dim = in_channels // 2 + 1, exactly like the PyTorch module.
    ceps = jax.random.normal(k1, (batch, steps, in_channels), jnp.float32)
    spec = jax.random.normal(k2, (batch, steps, in_channels), jnp.float32)

    fwd = jax.jit(lambda c, s: sparse_pitch_profile(c, s, params))
    ppt, ppf = fwd(ceps, spec)
    ppt = np.asarray(jax.block_until_ready(ppt))
    ppf = np.asarray(jax.block_until_ready(ppf))

    assert ppt.shape == (batch, steps, (88 + harms_range) * division)
    assert ppf.shape == (batch, steps, (88 + harms_range) * division)

    # --- references (numpy, exact f32) --------------------------------------
    ceps_np = np.asarray(ceps)[..., :D]
    spec_np = np.asarray(spec)[..., :D]
    # (a) full-precision semantics reference (bf16 operands -> loose tol)
    ppt_ref = np.einsum("bsd,fd->bsf", ceps_np, W_t)
    ppf_ref = np.einsum("bsd,fd->bsf", spec_np, W_f)
    np.testing.assert_allclose(ppt, ppt_ref, rtol=3e-2, atol=3e-2)
    np.testing.assert_allclose(ppf, ppf_ref, rtol=3e-2, atol=3e-2)
    # (b) bf16-quantized reference (same operand rounding as the kernel -> tight tol)
    q = lambda a: np.asarray(jnp.asarray(a).astype(jnp.bfloat16).astype(jnp.float32))
    ppt_ref_q = np.einsum("bsd,fd->bsf", q(ceps_np), q(W_t))
    ppf_ref_q = np.einsum("bsd,fd->bsf", q(spec_np), q(W_f))
    np.testing.assert_allclose(ppt, ppt_ref_q, rtol=1e-4, atol=1e-4)
    np.testing.assert_allclose(ppf, ppf_ref_q, rtol=1e-4, atol=1e-4)

    print("KERNEL_OK")
</pallas_src>

<mosaic_0001>
module attributes {stable_mosaic.version = 11 : i64} {
  func.func @_pitch_profile_kernel(%arg0: i32, %arg1: memref<16x128xf32, #tpu.memory_space<vmem>>, %arg2: memref<16x128xf32, #tpu.memory_space<vmem>>, %arg3: memref<128x112xbf16, #tpu.memory_space<vmem>>, %arg4: memref<128x112xbf16, #tpu.memory_space<vmem>>, %arg5: memref<16x112xf32, #tpu.memory_space<vmem>>, %arg6: memref<16x112xf32, #tpu.memory_space<vmem>>) attributes {dimension_semantics = [#tpu.dimension_semantics<parallel>], iteration_bounds = array<i64: 1>, scalar_prefetch = 0 : i64, scratch_operands = 0 : i64, tpu.core_type = #tpu.core_type<tc>, window_params = [{transform_indices = @transform_0, window_bounds = array<i64: 16, 128>}, {transform_indices = @transform_1, window_bounds = array<i64: 16, 128>}, {pipeline_mode = #tpu.pipeline_mode<synchronous>, transform_indices = @transform_2, window_bounds = array<i64: 128, 112>}, {pipeline_mode = #tpu.pipeline_mode<synchronous>, transform_indices = @transform_3, window_bounds = array<i64: 128, 112>}, {transform_indices = @transform_4, window_bounds = array<i64: 16, 112>}, {transform_indices = @transform_5, window_bounds = array<i64: 16, 112>}]} {
    %c0 = arith.constant 0 : index
    %c0_0 = arith.constant 0 : index
    %0 = vector.load %arg1[%c0, %c0_0] : memref<16x128xf32, #tpu.memory_space<vmem>>, vector<16x128xf32>
    %1 = arith.truncf %0 : vector<16x128xf32> to vector<16x128xbf16>
    %c0_1 = arith.constant 0 : index
    %c0_2 = arith.constant 0 : index
    %2 = vector.load %arg3[%c0_1, %c0_2] : memref<128x112xbf16, #tpu.memory_space<vmem>>, vector<128x112xbf16>
    %cst = arith.constant dense<0.000000e+00> : vector<16x112xf32>
    %3 = tpu.matmul %1, %2, %cst {dimension_numbers = #tpu.dot_dimension_numbers<[1], [0], [0], [1], [0, 0, 1, 1], [], []>} : vector<16x128xbf16>, vector<128x112xbf16>, vector<16x112xf32> -> vector<16x112xf32>
    %c0_3 = arith.constant 0 : index
    %c0_4 = arith.constant 0 : index
    %4 = vector.load %arg5[%c0_3, %c0_4] : memref<16x112xf32, #tpu.memory_space<vmem>>, vector<16x112xf32>
    tpu.vector_store %arg5[%c0_3, %c0_4], %3 {strides = array<i32>} : memref<16x112xf32, #tpu.memory_space<vmem>>, vector<16x112xf32>,
    %c0_5 = arith.constant 0 : index
    %c0_6 = arith.constant 0 : index
    %5 = vector.load %arg2[%c0_5, %c0_6] : memref<16x128xf32, #tpu.memory_space<vmem>>, vector<16x128xf32>
    %6 = arith.truncf %5 : vector<16x128xf32> to vector<16x128xbf16>
    %c0_7 = arith.constant 0 : index
    %c0_8 = arith.constant 0 : index
    %7 = vector.load %arg4[%c0_7, %c0_8] : memref<128x112xbf16, #tpu.memory_space<vmem>>, vector<128x112xbf16>
    %cst_9 = arith.constant dense<0.000000e+00> : vector<16x112xf32>
    %8 = tpu.matmul %6, %7, %cst_9 {dimension_numbers = #tpu.dot_dimension_numbers<[1], [0], [0], [1], [0, 0, 1, 1], [], []>} : vector<16x128xbf16>, vector<128x112xbf16>, vector<16x112xf32> -> vector<16x112xf32>
    %c0_10 = arith.constant 0 : index
    %c0_11 = arith.constant 0 : index
    %9 = vector.load %arg6[%c0_10, %c0_11] : memref<16x112xf32, #tpu.memory_space<vmem>>, vector<16x112xf32>
    tpu.vector_store %arg6[%c0_10, %c0_11], %8 {strides = array<i32>} : memref<16x112xf32, #tpu.memory_space<vmem>>, vector<16x112xf32>,
    return
  }
  func.func @transform_0(%arg0: i32) -> (i32, i32) {
    %c0_i32 = arith.constant 0 : i32
    %c0_i32_0 = arith.constant 0 : i32
    return %arg0, %c0_i32 : i32, i32
  }
  func.func @transform_1(%arg0: i32) -> (i32, i32) {
    %c0_i32 = arith.constant 0 : i32
    %c0_i32_0 = arith.constant 0 : i32
    return %arg0, %c0_i32 : i32, i32
  }
  func.func @transform_2(%arg0: i32) -> (i32, i32) {
    %c0_i32 = arith.constant 0 : i32
    %c0_i32_0 = arith.constant 0 : i32
    %c0_i32_1 = arith.constant 0 : i32
    return %c0_i32, %c0_i32_0 : i32, i32
  }
  func.func @transform_3(%arg0: i32) -> (i32, i32) {
    %c0_i32 = arith.constant 0 : i32
    %c0_i32_0 = arith.constant 0 : i32
    %c0_i32_1 = arith.constant 0 : i32
    return %c0_i32, %c0_i32_0 : i32, i32
  }
  func.func @transform_4(%arg0: i32) -> (i32, i32) {
    %c0_i32 = arith.constant 0 : i32
    %c0_i32_0 = arith.constant 0 : i32
    return %arg0, %c0_i32 : i32, i32
  }
  func.func @transform_5(%arg0: i32) -> (i32, i32) {
    %c0_i32 = arith.constant 0 : i32
    %c0_i32_0 = arith.constant 0 : i32
    return %arg0, %c0_i32 : i32, i32
  }
}

</mosaic_0001>

<llo_original>
// kernel: _lambda_.1
$region0: #{_lambda_.1}
  #allocation0 [shape = 'u32[]', space=smem, size = 0x4, offset = 0x4, fixed_abs, tag = 'smem constant byte address 0x4 - core index']
  #allocation1 [shape = 'u32[144,128]{1,0:T(1,128)}', space=vmem, size = 0x12000, scoped, tag = 'internal scratch']
  %s0 = inlined_call_operand.hbm [shape: f32[16,128], index: 0, kind: input, shape index: {}]
  %s1 = inlined_call_operand.vmem [shape: f32[16,128], index: 1, kind: input, shape index: {}]
  %s2 = inlined_call_operand.hbm [shape: bf16[128,112], index: 2, kind: input, shape index: {}]
  %s3 = inlined_call_operand.hbm [shape: bf16[128,112], index: 3, kind: input, shape index: {}]
  %s4 = inlined_call_operand.hbm [shape: f32[16,112], index: 4, kind: output, shape index: {0}]
  %s5 = inlined_call_operand.hbm [shape: f32[16,112], index: 5, kind: output, shape index: {1}]
  %6 = xla_tuple %s4, %s5
  %s7 = sld [smem:[#allocation0]]
  $region46: #{_lambda_.1} parent=0
    _
  %s9 = ssub.s32 1, %s7
  %s10 = scalar_select 0, %s9, %s7
  $region1: #{_lambda_.1} parent=0
    #allocation2 [shape = 'u8[8192]{0}', space=vmem, size = 0x2000, scoped, tag = 'input window, operand 0, single buffered']
    #allocation3 [shape = 's32[1]{0}', space=sflag, size = 0x4, scoped, tag = 'scoped memory for _lambda_.1']
    #allocation4 [shape = 's32[1]{0}', space=sflag, size = 0x4, scoped, tag = 'scoped memory for _lambda_.1']
    #allocation5 [shape = 'u8[32768]{0}', space=vmem, size = 0x8000, scoped, tag = 'input window, operand 2, single buffered']
    #allocation6 [shape = 's32[1]{0}', space=sflag, size = 0x4, scoped, tag = 'scoped memory for _lambda_.1']
    #allocation7 [shape = 'u8[32768]{0}', space=vmem, size = 0x8000, scoped, tag = 'input window, operand 3, single buffered']
    #allocation8 [shape = 'u8[8192]{0}', space=vmem, size = 0x2000, scoped, tag = 'output window, operand 0, single buffered']
    #allocation9 [shape = 'u8[8192]{0}', space=vmem, size = 0x2000, scoped, tag = 'output window, operand 1, single buffered']
    #allocation10 [shape = 's32[1]{0}', space=sflag, size = 0x4, scoped, tag = 'scoped memory for _lambda_.1']
    %11 = vsyncpa [#allocation3], 0
    %12 = vsyncpa [#allocation6], 0
    %13 = vsyncpa [#allocation4], 0
    %14 = vsyncpa [#allocation10], 0
    // Predicated region
    $region2: #{_lambda_.1} parent=1 // pred_check
      _
    $region3: #{_lambda_.1} parent=1 // pred_check_branch
      %16 = sbr.rel (0) target = $region5
    $region4: #{_lambda_.1} parent=1 // pred_region
      %s18 = ssub.s32 256, 256
      %19 = vsyncadd [#allocation3], %s18
      %s20 = sshll.u32 [#allocation2], 4
      %s21 = int_to_ptr.vmem [resolvable:$true] %s20
      %26 = dma.hbm_to_vmem [thread:$0]  %s0, 256, %s21, [#allocation3], 128, 128, 8
    $region5: #{_lambda_.1} parent=1 // pred_fallthru
      _
    // Predicated region
    $region6: #{_lambda_.1} parent=1 // pred_check
      _
    $region7: #{_lambda_.1} parent=1 // pred_check_branch
      %28 = sbr.rel (0) target = $region9
    $region8: #{_lambda_.1} parent=1 // pred_region
      _
    $region9: #{_lambda_.1} parent=1 // pred_fallthru
      _
    // Predicated region
    $region10: #{_lambda_.1} parent=1 // pred_check
      _
    $region11: #{_lambda_.1} parent=1 // pred_check_branch
      %30 = sbr.rel (0) target = $region13
    $region12: #{_lambda_.1} parent=1 // pred_region
      %s32 = ssub.s32 1024, 1024
      %33 = vsyncadd [#allocation6], %s32
      %s34 = sshll.u32 [#allocation5], 4
      %s35 = int_to_ptr.vmem [resolvable:$true] %s34
      %40 = dma.hbm_to_vmem [thread:$0]  %s2, 1024, %s35, [#allocation6], 64, 64, 4
    $region13: #{_lambda_.1} parent=1 // pred_fallthru
      _
    // Predicated region
    $region14: #{_lambda_.1} parent=1 // pred_check
      _
    $region15: #{_lambda_.1} parent=1 // pred_check_branch
      %42 = sbr.rel (0) target = $region17
    $region16: #{_lambda_.1} parent=1 // pred_region
      %s44 = ssub.s32 1024, 1024
      %45 = vsyncadd [#allocation6], %s44
      %s46 = sshll.u32 [#allocation7], 4
      %s47 = int_to_ptr.vmem [resolvable:$true] %s46
      %52 = dma.hbm_to_vmem [thread:$0]  %s3, 1024, %s47, [#allocation6], 64, 64, 4
    $region17: #{_lambda_.1} parent=1 // pred_fallthru
      _
    // Predicated region
    $region18: #{_lambda_.1} parent=1 // pred_check
      _
    $region19: #{_lambda_.1} parent=1 // pred_check_branch
      %54 = sbr.rel (0) target = $region21
    $region20: #{_lambda_.1} parent=1 // pred_region
      %55 = dma.done [#allocation3], 256
    $region21: #{_lambda_.1} parent=1 // pred_fallthru
      _
    // Predicated region
    $region22: #{_lambda_.1} parent=1 // pred_check
      _
    $region23: #{_lambda_.1} parent=1 // pred_check_branch
      %57 = sbr.rel (0) target = $region25
    $region24: #{_lambda_.1} parent=1 // pred_region
      %58 = dma.done [#allocation6], 1024
    $region25: #{_lambda_.1} parent=1 // pred_fallthru
      _
    // Predicated region
    $region26: #{_lambda_.1} parent=1 // pred_check
      _
    $region27: #{_lambda_.1} parent=1 // pred_check_branch
      %60 = sbr.rel (0) target = $region29
    $region28: #{_lambda_.1} parent=1 // pred_region
      %61 = dma.done [#allocation6], 1024
    $region29: #{_lambda_.1} parent=1 // pred_fallthru
      _
    %v63 = vld [vmem:[#allocation2] sm:$0xff]
    %v64 = vld [vmem:[#allocation2 + $0x8] sm:$0xff]
    %v65 = vpack.c.bf16 %v64, %v63
    %v66 = vld [vmem:[#allocation5] sm:$0xf]
    %v67 = vld [vmem:[#allocation5 + $0x4] sm:$0xf]
    %v68 = vld [vmem:[#allocation5 + $0x8] sm:$0xf]
    %v69 = vld [vmem:[#allocation5 + $0xc] sm:$0xf]
    %v70 = vld [vmem:[#allocation5 + $0x10] sm:$0xf]
    %v71 = vld [vmem:[#allocation5 + $0x14] sm:$0xf]
    %v72 = vld [vmem:[#allocation5 + $0x18] sm:$0xf]
    %v73 = vld [vmem:[#allocation5 + $0x1c] sm:$0xf]
    %v74 = vld [vmem:[#allocation5 + $0x20] sm:$0xf]
    %v75 = vld [vmem:[#allocation5 + $0x24] sm:$0xf]
    %v76 = vld [vmem:[#allocation5 + $0x28] sm:$0xf]
    %v77 = vld [vmem:[#allocation5 + $0x2c] sm:$0xf]
    %v78 = vld [vmem:[#allocation5 + $0x30] sm:$0xf]
    %v79 = vld [vmem:[#allocation5 + $0x34] sm:$0xf]
    %v80 = vld [vmem:[#allocation5 + $0x38] sm:$0xf]
    %v81 = vld [vmem:[#allocation5 + $0x3c] sm:$0xf]
    %v98 = vunpack.c.l.b16 %v66
    %v99 = vunpack.c.l.b16 %v67
    %v100 = vunpack.c.l.b16 %v68
    %v101 = vunpack.c.l.b16 %v69
    %v102 = vunpack.c.l.b16 %v70
    %v103 = vunpack.c.l.b16 %v71
    %v104 = vunpack.c.l.b16 %v72
    %v105 = vunpack.c.l.b16 %v73
    %v106 = vunpack.c.l.b16 %v74
    %v107 = vunpack.c.l.b16 %v75
    %v108 = vunpack.c.l.b16 %v76
    %v109 = vunpack.c.l.b16 %v77
    %v110 = vunpack.c.l.b16 %v78
    %v111 = vunpack.c.l.b16 %v79
    %v112 = vunpack.c.l.b16 %v80
    %v113 = vunpack.c.l.b16 %v81
    %v114 = vpack.c.b16 %v99, %v98
    %v115 = vpack.c.b16 %v101, %v100
    %v116 = vpack.c.b16 %v103, %v102
    %v117 = vpack.c.b16 %v105, %v104
    %v118 = vpack.c.b16 %v107, %v106
    %v119 = vpack.c.b16 %v109, %v108
    %v120 = vpack.c.b16 %v111, %v110
    %v121 = vpack.c.b16 %v113, %v112
    %130 = vmatprep.subr.bf16.mxu0 0
    %131 = vmatpush1.bf16.msra.mxu0 %v114
    %132 = vmatprep.subr.bf16.mxu0 0
    %133 = vmatpush1.bf16.msra.mxu0 %v115
    %134 = vmatprep.subr.bf16.mxu0 0
    %135 = vmatpush1.bf16.msra.mxu0 %v116
    %136 = vmatprep.subr.bf16.mxu0 0
    %137 = vmatpush1.bf16.msra.mxu0 %v117
    %138 = vmatprep.subr.bf16.mxu0 0
    %139 = vmatpush1.bf16.msra.mxu0 %v118
    %140 = vmatprep.subr.bf16.mxu0 0
    %141 = vmatpush1.bf16.msra.mxu0 %v119
    %142 = vmatprep.subr.bf16.mxu0 0
    %143 = vmatpush1.bf16.msra.mxu0 %v120
    %144 = vmatprep.subr.bf16.mxu0 0
    %145 = vmatpush1.bf16.msra.mxu0 %v121
    %146 = vmatprep.subr.bf16.mxu0 0
    %147 = vmatpush1.bf16.msra.mxu0 0
    %148 = vmatprep.subr.bf16.mxu0 0
    %149 = vmatpush1.bf16.msra.mxu0 0
    %150 = vmatprep.subr.bf16.mxu0 0
    %151 = vmatpush1.bf16.msra.mxu0 0
    %152 = vmatprep.subr.bf16.mxu0 0
    %153 = vmatpush1.bf16.msra.mxu0 0
    %154 = vmatprep.subr.bf16.mxu0 0
    %155 = vmatpush1.bf16.msra.mxu0 0
    %156 = vmatprep.subr.bf16.mxu0 0
    %157 = vmatpush1.bf16.msra.mxu0 0
    %158 = vmatprep.subr.bf16.mxu0 0
    %159 = vmatpush1.bf16.msra.mxu0 0
    %160 = vmatprep.subr.bf16.mxu0 0
    %161 = vmatpush1.bf16.msra.mxu0 0
    %162 = vmatprep.mubr.bf16.mxu0 0
    %163 = vmatmul.mubr.bf16.gmra.mrb[0].mxu0 %v65
    %v164 = vpop.f32.mrb[0].mxu0
    %v165 = vadd.f32 0.0, %v164
    %v166 = vpop.f32.mrb[0].mxu0
    %v167 = vpop.f32.mrb[0].mxu0
    %v168 = vadd.f32 0.0, %v167
    %v169 = vpop.f32.mrb[0].mxu0
    %170 = vdwg.mxu0
    %vm171 = vcmask 916480
    %172 = vst.msk [vmem:[#allocation8] sm:$0xff] %vm171, %v165
    %173 = vst.msk [vmem:[#allocation8 + $0x8] sm:$0xff] %vm171, %v168
    %v174 = vld [vmem:[%s1] sm:$0xff]
    %v175 = vld [vmem:[%s1 + $0x8] sm:$0xff]
    %v176 = vpack.c.bf16 %v175, %v174
    %v177 = vld [vmem:[#allocation7] sm:$0xf]
    %v178 = vld [vmem:[#allocation7 + $0x4] sm:$0xf]
    %v179 = vld [vmem:[#allocation7 + $0x8] sm:$0xf]
    %v180 = vld [vmem:[#allocation7 + $0xc] sm:$0xf]
    %v181 = vld [vmem:[#allocation7 + $0x10] sm:$0xf]
    %v182 = vld [vmem:[#allocation7 + $0x14] sm:$0xf]
    %v183 = vld [vmem:[#allocation7 + $0x18] sm:$0xf]
    %v184 = vld [vmem:[#allocation7 + $0x1c] sm:$0xf]
    %v185 = vld [vmem:[#allocation7 + $0x20] sm:$0xf]
    %v186 = vld [vmem:[#allocation7 + $0x24] sm:$0xf]
    %v187 = vld [vmem:[#allocation7 + $0x28] sm:$0xf]
    %v188 = vld [vmem:[#allocation7 + $0x2c] sm:$0xf]
    %v189 = vld [vmem:[#allocation7 + $0x30] sm:$0xf]
    %v190 = vld [vmem:[#allocation7 + $0x34] sm:$0xf]
    %v191 = vld [vmem:[#allocation7 + $0x38] sm:$0xf]
    %v192 = vld [vmem:[#allocation7 + $0x3c] sm:$0xf]
    %v209 = vunpack.c.l.b16 %v177
    %v210 = vunpack.c.l.b16 %v178
    %v211 = vunpack.c.l.b16 %v179
    %v212 = vunpack.c.l.b16 %v180
    %v213 = vunpack.c.l.b16 %v181
    %v214 = vunpack.c.l.b16 %v182
    %v215 = vunpack.c.l.b16 %v183
    %v216 = vunpack.c.l.b16 %v184
    %v217 = vunpack.c.l.b16 %v185
    %v218 = vunpack.c.l.b16 %v186
    %v219 = vunpack.c.l.b16 %v187
    %v220 = vunpack.c.l.b16 %v188
    %v221 = vunpack.c.l.b16 %v189
    %v222 = vunpack.c.l.b16 %v190
    %v223 = vunpack.c.l.b16 %v191
    %v224 = vunpack.c.l.b16 %v192
    %v225 = vpack.c.b16 %v210, %v209
    %v226 = vpack.c.b16 %v212, %v211
    %v227 = vpack.c.b16 %v214, %v213
    %v228 = vpack.c.b16 %v216, %v215
    %v229 = vpack.c.b16 %v218, %v217
    %v230 = vpack.c.b16 %v220, %v219
    %v231 = vpack.c.b16 %v222, %v221
    %v232 = vpack.c.b16 %v224, %v223
    %241 = vmatprep.subr.bf16.mxu0 0
    %242 = vmatpush1.bf16.msra.mxu0 %v225
    %243 = vmatprep.subr.bf16.mxu0 0
    %244 = vmatpush1.bf16.msra.mxu0 %v226
    %245 = vmatprep.subr.bf16.mxu0 0
    %246 = vmatpush1.bf16.msra.mxu0 %v227
    %247 = vmatprep.subr.bf16.mxu0 0
    %248 = vmatpush1.bf16.msra.mxu0 %v228
    %249 = vmatprep.subr.bf16.mxu0 0
    %250 = vmatpush1.bf16.msra.mxu0 %v229
    %251 = vmatprep.subr.bf16.mxu0 0
    %252 = vmatpush1.bf16.msra.mxu0 %v230
    %253 = vmatprep.subr.bf16.mxu0 0
    %254 = vmatpush1.bf16.msra.mxu0 %v231
    %255 = vmatprep.subr.bf16.mxu0 0
    %256 = vmatpush1.bf16.msra.mxu0 %v232
    %257 = vmatprep.subr.bf16.mxu0 0
    %258 = vmatpush1.bf16.msra.mxu0 0
    %259 = vmatprep.subr.bf16.mxu0 0
    %260 = vmatpush1.bf16.msra.mxu0 0
    %261 = vmatprep.subr.bf16.mxu0 0
    %262 = vmatpush1.bf16.msra.mxu0 0
    %263 = vmatprep.subr.bf16.mxu0 0
    %264 = vmatpush1.bf16.msra.mxu0 0
    %265 = vmatprep.subr.bf16.mxu0 0
    %266 = vmatpush1.bf16.msra.mxu0 0
    %267 = vmatprep.subr.bf16.mxu0 0
    %268 = vmatpush1.bf16.msra.mxu0 0
    %269 = vmatprep.subr.bf16.mxu0 0
    %270 = vmatpush1.bf16.msra.mxu0 0
    %271 = vmatprep.subr.bf16.mxu0 0
    %272 = vmatpush1.bf16.msra.mxu0 0
    %273 = vmatprep.mubr.bf16.mxu0 0
    %274 = vmatmul.mubr.bf16.gmra.mrb[0].mxu0 %v176
    %v275 = vpop.f32.mrb[0].mxu0
    %v276 = vadd.f32 0.0, %v275
    %v277 = vpop.f32.mrb[0].mxu0
    %v278 = vpop.f32.mrb[0].mxu0
    %v279 = vadd.f32 0.0, %v278
    %v280 = vpop.f32.mrb[0].mxu0
    %281 = vdwg.mxu0
    %282 = vst.msk [vmem:[#allocation9] sm:$0xff] %vm171, %v276
    %283 = vst.msk [vmem:[#allocation9 + $0x8] sm:$0xff] %vm171, %v279
    // Predicated region
    $region30: #{_lambda_.1} parent=1 // pred_check
      _
    $region31: #{_lambda_.1} parent=1 // pred_check_branch
      %285 = sbr.rel (0) target = $region33
    $region32: #{_lambda_.1} parent=1 // pred_region
      %s287 = ssub.s32 256, 256
      %288 = vsyncadd [#allocation4], %s287
      %s289 = sshll.u32 [#allocation8], 4
      %s290 = int_to_ptr.vmem [resolvable:$true] %s289
      %295 = dma.vmem_to_hbm [thread:$0]  %s290, 256, %s4, [#allocation4], 128, 128, 8
    $region33: #{_lambda_.1} parent=1 // pred_fallthru
      _
    // Predicated region
    $region34: #{_lambda_.1} parent=1 // pred_check
      _
    $region35: #{_lambda_.1} parent=1 // pred_check_branch
      %297 = sbr.rel (0) target = $region37
    $region36: #{_lambda_.1} parent=1 // pred_region
      %s299 = ssub.s32 256, 256
      %300 = vsyncadd [#allocation10], %s299
      %s301 = sshll.u32 [#allocation9], 4
      %s302 = int_to_ptr.vmem [resolvable:$true] %s301
      %307 = dma.vmem_to_hbm [thread:$0]  %s302, 256, %s5, [#allocation10], 128, 128, 8
    $region37: #{_lambda_.1} parent=1 // pred_fallthru
      _
    // Predicated region
    $region38: #{_lambda_.1} parent=1 // pred_check
      _
    $region39: #{_lambda_.1} parent=1 // pred_check_branch
      %309 = sbr.rel (0) target = $region41
    $region40: #{_lambda_.1} parent=1 // pred_region
      %310 = dma.done [#allocation4], 256
    $region41: #{_lambda_.1} parent=1 // pred_fallthru
      _
    // Predicated region
    $region42: #{_lambda_.1} parent=1 // pred_check
      _
    $region43: #{_lambda_.1} parent=1 // pred_check_branch
      %312 = sbr.rel (0) target = $region45
    $region44: #{_lambda_.1} parent=1 // pred_region
      %313 = dma.done [#allocation10], 256
    $region45: #{_lambda_.1} parent=1 // pred_fallthru
      _
    %314 = vsyncpa [#allocation3], 1
    %315 = vsyncpa [#allocation6], 1
    %316 = vsyncpa [#allocation4], 1
    %317 = vsyncpa [#allocation10], 1

</llo_original>
